<compile_context>
chip_gen: v6e
topology: v6e:2x2x1
jax: 0.10.0
libtpu: 0.0.40
codegen_flags: <defaults>
</compile_context>

<pallas_src>
import jax
import jax.numpy as jnp
from jax import lax
from jax.experimental import pallas as pl
from jax.experimental.pallas import tpu as pltpu

LN_EPS = 1e-5


def embbag_ln_kernel(idx_ref, emb_ref, gb_ref, out_ref):
    """Fused EmbeddingBag(mode='sum') + LayerNorm over the feature dim.

    idx_ref: (B, L)    int32    SMEM -- bag indices, read as scalars
    emb_ref: (V, 1, D) float32  VMEM -- embedding rows behind a leading dyn-indexable dim
    gb_ref:  (2, D)    float32  VMEM -- row 0 = LayerNorm weight, row 1 = bias
    out_ref: (B, D)    float32  VMEM
    """
    B, L = idx_ref.shape
    V = emb_ref.shape[0]
    D = emb_ref.shape[-1]

    gb = gb_ref[...]                      # single vld for both params
    gamma = gb[0:1, :]                    # (1, D)
    beta = gb[1:2, :]                     # (1, D)

    # EmbeddingBag 'sum': B*L scalar-driven VPU row adds (no MXU, no one-hot).
    rows = []
    for b in range(B):                    # static unroll: B is tiny
        acc = jnp.zeros((1, D), jnp.float32)
        for l in range(L):                # static unroll: L is tiny
            # Clamp on the scalar ALU (huge slack) -> no silent OOB VMEM read.
            idx = jnp.clip(idx_ref[b, l], 0, V - 1)
            acc = acc + emb_ref[idx]      # (1, D) VPU row add
        rows.append(acc)
    y = jnp.concatenate(rows, axis=0)     # (B, D) slab

    # LayerNorm once on the whole slab: 2 cross-lane reduces (XLU), rsqrt on
    # the EUP, one gamma/beta broadcast, one store.
    mean = jnp.mean(y, axis=-1, keepdims=True)
    var = jnp.mean((y - mean) ** 2, axis=-1, keepdims=True)
    normed = (y - mean) * lax.rsqrt(var + LN_EPS)
    out_ref[...] = normed * gamma + beta


def model_forward(indices, emb_weight, gamma, beta):
    B, L = indices.shape
    V, D = emb_weight.shape
    gb = jnp.stack([gamma, beta], axis=0).astype(jnp.float32)   # (2, D) packed params
    return pl.pallas_call(
        embbag_ln_kernel,
        out_shape=jax.ShapeDtypeStruct((B, D), jnp.float32),
        in_specs=[
            pl.BlockSpec(memory_space=pltpu.MemorySpace.SMEM),  # indices (scalars)
            pl.BlockSpec(memory_space=pltpu.MemorySpace.VMEM),  # embedding rows
            pl.BlockSpec(memory_space=pltpu.MemorySpace.VMEM),  # packed gamma/beta
        ],
        out_specs=pl.BlockSpec(memory_space=pltpu.MemorySpace.VMEM),
    )(
        indices.astype(jnp.int32),
        emb_weight.astype(jnp.float32).reshape(V, 1, D),
        gb,
    )


def _reference(indices, emb_weight, gamma, beta):
    # Pure-JAX reference (indices assumed already in range).
    gathered = emb_weight[indices]                 # (B, L, D)
    y = gathered.sum(axis=1)                       # (B, D)
    mean = y.mean(-1, keepdims=True)
    var = ((y - mean) ** 2).mean(-1, keepdims=True)
    return (y - mean) / jnp.sqrt(var + LN_EPS) * gamma + beta


if __name__ == "__main__":
    V, D = 5, 3        # nn.EmbeddingBag(5, 3)

    # Literal bag indices from the PyTorch spec (contain an out-of-range 5;
    # the kernel clamps in-kernel, the reference uses the clipped copy).
    raw = jnp.array([[1, 1, 2, 4, 0], [4, 3, 1, 2, 5]], dtype=jnp.int32)

    # Deterministic parameter init (EmbeddingBag weight ~ N(0,1); LayerNorm
    # weight = 1, bias = 0, matching PyTorch defaults).
    key = jax.random.PRNGKey(0)
    emb_weight = jax.random.normal(key, (V, D), dtype=jnp.float32)
    gamma = jnp.ones((D,), dtype=jnp.float32)
    beta = jnp.zeros((D,), dtype=jnp.float32)

    out = jax.block_until_ready(model_forward(raw, emb_weight, gamma, beta))

    ref = _reference(jnp.clip(raw, 0, V - 1), emb_weight, gamma, beta)
    assert out.shape == (raw.shape[0], D)
    assert jnp.allclose(out, ref, atol=1e-5, rtol=1e-5)

    print("KERNEL_OK")
</pallas_src>

<mosaic_0001>
module attributes {stable_mosaic.version = 11 : i64} {
  func.func @embbag_ln_kernel(%arg0: memref<2x5xi32, #tpu.memory_space<smem>>, %arg1: memref<5x1x3xf32, #tpu.memory_space<vmem>>, %arg2: memref<2x3xf32, #tpu.memory_space<vmem>>, %arg3: memref<2x3xf32, #tpu.memory_space<vmem>>) attributes {dimension_semantics = [], scalar_prefetch = 0 : i64, scratch_operands = 0 : i64, tpu.core_type = #tpu.core_type<tc>} {
    %c0 = arith.constant 0 : index
    %c0_0 = arith.constant 0 : index
    %0 = vector.load %arg2[%c0, %c0_0] : memref<2x3xf32, #tpu.memory_space<vmem>>, vector<2x3xf32>
    %1 = vector.extract_strided_slice %0 {offsets = [0, 0], sizes = [1, 3], strides = [1, 1]} : vector<2x3xf32> to vector<1x3xf32>
    %2 = vector.extract_strided_slice %0 {offsets = [1, 0], sizes = [1, 3], strides = [1, 1]} : vector<2x3xf32> to vector<1x3xf32>
    %cst = arith.constant 0.000000e+00 : f32
    %3 = vector.broadcast %cst : f32 to vector<1x3xf32>
    %c0_1 = arith.constant 0 : index
    %c0_2 = arith.constant 0 : index
    %4 = memref.load %arg0[%c0_1, %c0_2] : memref<2x5xi32, #tpu.memory_space<smem>>
    %c0_i32 = arith.constant 0 : i32
    %c4_i32 = arith.constant 4 : i32
    %5 = arith.maxsi %c0_i32, %4 : i32
    %6 = arith.minsi %c4_i32, %5 : i32
    %7 = arith.index_cast %6 : i32 to index
    %c0_3 = arith.constant 0 : index
    %c0_4 = arith.constant 0 : index
    %8 = vector.load %arg1[%7, %c0_3, %c0_4] : memref<5x1x3xf32, #tpu.memory_space<vmem>>, vector<1x1x3xf32>
    %9 = vector.shape_cast %8 : vector<1x1x3xf32> to vector<1x3xf32>
    %10 = arith.addf %3, %9 : vector<1x3xf32>
    %c0_5 = arith.constant 0 : index
    %c1 = arith.constant 1 : index
    %11 = memref.load %arg0[%c0_5, %c1] : memref<2x5xi32, #tpu.memory_space<smem>>
    %c0_i32_6 = arith.constant 0 : i32
    %c4_i32_7 = arith.constant 4 : i32
    %12 = arith.maxsi %c0_i32_6, %11 : i32
    %13 = arith.minsi %c4_i32_7, %12 : i32
    %14 = arith.index_cast %13 : i32 to index
    %c0_8 = arith.constant 0 : index
    %c0_9 = arith.constant 0 : index
    %15 = vector.load %arg1[%14, %c0_8, %c0_9] : memref<5x1x3xf32, #tpu.memory_space<vmem>>, vector<1x1x3xf32>
    %16 = vector.shape_cast %15 : vector<1x1x3xf32> to vector<1x3xf32>
    %17 = arith.addf %10, %16 : vector<1x3xf32>
    %c0_10 = arith.constant 0 : index
    %c2 = arith.constant 2 : index
    %18 = memref.load %arg0[%c0_10, %c2] : memref<2x5xi32, #tpu.memory_space<smem>>
    %c0_i32_11 = arith.constant 0 : i32
    %c4_i32_12 = arith.constant 4 : i32
    %19 = arith.maxsi %c0_i32_11, %18 : i32
    %20 = arith.minsi %c4_i32_12, %19 : i32
    %21 = arith.index_cast %20 : i32 to index
    %c0_13 = arith.constant 0 : index
    %c0_14 = arith.constant 0 : index
    %22 = vector.load %arg1[%21, %c0_13, %c0_14] : memref<5x1x3xf32, #tpu.memory_space<vmem>>, vector<1x1x3xf32>
    %23 = vector.shape_cast %22 : vector<1x1x3xf32> to vector<1x3xf32>
    %24 = arith.addf %17, %23 : vector<1x3xf32>
    %c0_15 = arith.constant 0 : index
    %c3 = arith.constant 3 : index
    %25 = memref.load %arg0[%c0_15, %c3] : memref<2x5xi32, #tpu.memory_space<smem>>
    %c0_i32_16 = arith.constant 0 : i32
    %c4_i32_17 = arith.constant 4 : i32
    %26 = arith.maxsi %c0_i32_16, %25 : i32
    %27 = arith.minsi %c4_i32_17, %26 : i32
    %28 = arith.index_cast %27 : i32 to index
    %c0_18 = arith.constant 0 : index
    %c0_19 = arith.constant 0 : index
    %29 = vector.load %arg1[%28, %c0_18, %c0_19] : memref<5x1x3xf32, #tpu.memory_space<vmem>>, vector<1x1x3xf32>
    %30 = vector.shape_cast %29 : vector<1x1x3xf32> to vector<1x3xf32>
    %31 = arith.addf %24, %30 : vector<1x3xf32>
    %c0_20 = arith.constant 0 : index
    %c4 = arith.constant 4 : index
    %32 = memref.load %arg0[%c0_20, %c4] : memref<2x5xi32, #tpu.memory_space<smem>>
    %c0_i32_21 = arith.constant 0 : i32
    %c4_i32_22 = arith.constant 4 : i32
    %33 = arith.maxsi %c0_i32_21, %32 : i32
    %34 = arith.minsi %c4_i32_22, %33 : i32
    %35 = arith.index_cast %34 : i32 to index
    %c0_23 = arith.constant 0 : index
    %c0_24 = arith.constant 0 : index
    %36 = vector.load %arg1[%35, %c0_23, %c0_24] : memref<5x1x3xf32, #tpu.memory_space<vmem>>, vector<1x1x3xf32>
    %37 = vector.shape_cast %36 : vector<1x1x3xf32> to vector<1x3xf32>
    %38 = arith.addf %31, %37 : vector<1x3xf32>
    %cst_25 = arith.constant 0.000000e+00 : f32
    %39 = vector.broadcast %cst_25 : f32 to vector<1x3xf32>
    %c1_26 = arith.constant 1 : index
    %c0_27 = arith.constant 0 : index
    %40 = memref.load %arg0[%c1_26, %c0_27] : memref<2x5xi32, #tpu.memory_space<smem>>
    %c0_i32_28 = arith.constant 0 : i32
    %c4_i32_29 = arith.constant 4 : i32
    %41 = arith.maxsi %c0_i32_28, %40 : i32
    %42 = arith.minsi %c4_i32_29, %41 : i32
    %43 = arith.index_cast %42 : i32 to index
    %c0_30 = arith.constant 0 : index
    %c0_31 = arith.constant 0 : index
    %44 = vector.load %arg1[%43, %c0_30, %c0_31] : memref<5x1x3xf32, #tpu.memory_space<vmem>>, vector<1x1x3xf32>
    %45 = vector.shape_cast %44 : vector<1x1x3xf32> to vector<1x3xf32>
    %46 = arith.addf %39, %45 : vector<1x3xf32>
    %c1_32 = arith.constant 1 : index
    %c1_33 = arith.constant 1 : index
    %47 = memref.load %arg0[%c1_32, %c1_33] : memref<2x5xi32, #tpu.memory_space<smem>>
    %c0_i32_34 = arith.constant 0 : i32
    %c4_i32_35 = arith.constant 4 : i32
    %48 = arith.maxsi %c0_i32_34, %47 : i32
    %49 = arith.minsi %c4_i32_35, %48 : i32
    %50 = arith.index_cast %49 : i32 to index
    %c0_36 = arith.constant 0 : index
    %c0_37 = arith.constant 0 : index
    %51 = vector.load %arg1[%50, %c0_36, %c0_37] : memref<5x1x3xf32, #tpu.memory_space<vmem>>, vector<1x1x3xf32>
    %52 = vector.shape_cast %51 : vector<1x1x3xf32> to vector<1x3xf32>
    %53 = arith.addf %46, %52 : vector<1x3xf32>
    %c1_38 = arith.constant 1 : index
    %c2_39 = arith.constant 2 : index
    %54 = memref.load %arg0[%c1_38, %c2_39] : memref<2x5xi32, #tpu.memory_space<smem>>
    %c0_i32_40 = arith.constant 0 : i32
    %c4_i32_41 = arith.constant 4 : i32
    %55 = arith.maxsi %c0_i32_40, %54 : i32
    %56 = arith.minsi %c4_i32_41, %55 : i32
    %57 = arith.index_cast %56 : i32 to index
    %c0_42 = arith.constant 0 : index
    %c0_43 = arith.constant 0 : index
    %58 = vector.load %arg1[%57, %c0_42, %c0_43] : memref<5x1x3xf32, #tpu.memory_space<vmem>>, vector<1x1x3xf32>
    %59 = vector.shape_cast %58 : vector<1x1x3xf32> to vector<1x3xf32>
    %60 = arith.addf %53, %59 : vector<1x3xf32>
    %c1_44 = arith.constant 1 : index
    %c3_45 = arith.constant 3 : index
    %61 = memref.load %arg0[%c1_44, %c3_45] : memref<2x5xi32, #tpu.memory_space<smem>>
    %c0_i32_46 = arith.constant 0 : i32
    %c4_i32_47 = arith.constant 4 : i32
    %62 = arith.maxsi %c0_i32_46, %61 : i32
    %63 = arith.minsi %c4_i32_47, %62 : i32
    %64 = arith.index_cast %63 : i32 to index
    %c0_48 = arith.constant 0 : index
    %c0_49 = arith.constant 0 : index
    %65 = vector.load %arg1[%64, %c0_48, %c0_49] : memref<5x1x3xf32, #tpu.memory_space<vmem>>, vector<1x1x3xf32>
    %66 = vector.shape_cast %65 : vector<1x1x3xf32> to vector<1x3xf32>
    %67 = arith.addf %60, %66 : vector<1x3xf32>
    %c1_50 = arith.constant 1 : index
    %c4_51 = arith.constant 4 : index
    %68 = memref.load %arg0[%c1_50, %c4_51] : memref<2x5xi32, #tpu.memory_space<smem>>
    %c0_i32_52 = arith.constant 0 : i32
    %c4_i32_53 = arith.constant 4 : i32
    %69 = arith.maxsi %c0_i32_52, %68 : i32
    %70 = arith.minsi %c4_i32_53, %69 : i32
    %71 = arith.index_cast %70 : i32 to index
    %c0_54 = arith.constant 0 : index
    %c0_55 = arith.constant 0 : index
    %72 = vector.load %arg1[%71, %c0_54, %c0_55] : memref<5x1x3xf32, #tpu.memory_space<vmem>>, vector<1x1x3xf32>
    %73 = vector.shape_cast %72 : vector<1x1x3xf32> to vector<1x3xf32>
    %74 = arith.addf %67, %73 : vector<1x3xf32>
    %75 = tpu.concatenate %38, %74 in 0 : vector<1x3xf32>, vector<1x3xf32> -> vector<2x3xf32>
    %cst_56 = arith.constant dense<0.000000e+00> : vector<2xf32>
    %76 = vector.multi_reduction <add>, %75, %cst_56 [1] : vector<2x3xf32> to vector<2xf32>
    %77 = vector.shape_cast %76 : vector<2xf32> to vector<2x1xf32>
    %cst_57 = arith.constant 3.000000e+00 : f32
    %78 = vector.broadcast %cst_57 : f32 to vector<2x1xf32>
    %79 = arith.divf %77, %78 : vector<2x1xf32>
    %80 = vector.broadcast %79 : vector<2x1xf32> to vector<2x3xf32>
    %81 = arith.subf %75, %80 : vector<2x3xf32>
    %82 = arith.mulf %81, %81 : vector<2x3xf32>
    %cst_58 = arith.constant dense<0.000000e+00> : vector<2xf32>
    %83 = vector.multi_reduction <add>, %82, %cst_58 [1] : vector<2x3xf32> to vector<2xf32>
    %84 = vector.shape_cast %83 : vector<2xf32> to vector<2x1xf32>
    %cst_59 = arith.constant 3.000000e+00 : f32
    %85 = vector.broadcast %cst_59 : f32 to vector<2x1xf32>
    %86 = arith.divf %84, %85 : vector<2x1xf32>
    %87 = vector.broadcast %79 : vector<2x1xf32> to vector<2x3xf32>
    %88 = arith.subf %75, %87 : vector<2x3xf32>
    %cst_60 = arith.constant 9.99999974E-6 : f32
    %89 = vector.broadcast %cst_60 : f32 to vector<2x1xf32>
    %90 = arith.addf %86, %89 : vector<2x1xf32>
    %91 = math.rsqrt %90 : vector<2x1xf32>
    %92 = vector.broadcast %91 : vector<2x1xf32> to vector<2x3xf32>
    %93 = arith.mulf %88, %92 : vector<2x3xf32>
    %94 = vector.broadcast %1 : vector<1x3xf32> to vector<2x3xf32>
    %95 = arith.mulf %93, %94 : vector<2x3xf32>
    %96 = vector.broadcast %2 : vector<1x3xf32> to vector<2x3xf32>
    %97 = arith.addf %95, %96 : vector<2x3xf32>
    %c0_61 = arith.constant 0 : index
    %c0_62 = arith.constant 0 : index
    %98 = vector.load %arg3[%c0_61, %c0_62] : memref<2x3xf32, #tpu.memory_space<vmem>>, vector<2x3xf32>
    tpu.vector_store %arg3[%c0_61, %c0_62], %97 {strides = array<i32>} : memref<2x3xf32, #tpu.memory_space<vmem>>, vector<2x3xf32>,
    return
  }
}

</mosaic_0001>

<llo_original>
// kernel: tpu_custom_call.1
$region0: #{tpu_custom_call.1}
  #allocation0 [shape = 'u32[]', space=smem, size = 0x4, offset = 0x4, fixed_abs, tag = 'smem constant byte address 0x4 - core index']
  #allocation1 [shape = 'u32[144,128]{1,0:T(1,128)}', space=vmem, size = 0x12000, scoped, tag = 'internal scratch']
  %s0 = inlined_call_operand.vmem [shape: s32[2,5], index: 0, kind: input, shape index: {}]
  %s1 = inlined_call_operand.vmem [shape: f32[5,1,3], index: 1, kind: input, shape index: {}]
  %s2 = inlined_call_operand.vmem [shape: f32[2,3], index: 2, kind: input, shape index: {}]
  %s3 = inlined_call_operand.hbm [shape: f32[2,3], index: 3, kind: output, shape index: {}]
  %s4 = sld [smem:[#allocation0]]
  $region26: #{tpu_custom_call.1} parent=0
    _
  %s6 = ssub.s32 1, %s4
  %s7 = scalar_select 0, %s6, %s4
  $region1: #{tpu_custom_call.1} parent=0
    #allocation2 [shape = 'u8[1024]{0}', space=smem, size = 0x400, scoped, tag = 'input window, operand 0, single buffered']
    #allocation3 [shape = 's32[1]{0}', space=sflag, size = 0x4, scoped, tag = 'scoped memory for tpu_custom_call.1']
    #allocation4 [shape = 's32[1]{0}', space=sflag, size = 0x4, scoped, tag = 'scoped memory for tpu_custom_call.1']
    #allocation5 [shape = 'u8[1024]{0}', space=vmem, size = 0x400, scoped, tag = 'output window, operand 0, single buffered']
    %8 = vsyncpa [#allocation4], 0
    %9 = vsyncpa [#allocation3], 0
    // Predicated region
    $region2: #{tpu_custom_call.1} parent=1 // pred_check
      _
    $region3: #{tpu_custom_call.1} parent=1 // pred_check_branch
      %11 = sbr.rel (0) target = $region5
    $region4: #{tpu_custom_call.1} parent=1 // pred_region
      %s13 = ssub.s32 32, 32
      %14 = vsyncadd [#allocation4], %s13
      %s16 = sshll.u32 %s0, 4
      %s17 = int_to_ptr.vmem [resolvable:$true] %s16
      %19 = dma.vmem_to_smem %s17, 32, [#allocation2], [#allocation4]
    $region5: #{tpu_custom_call.1} parent=1 // pred_fallthru
      _
    // Predicated region
    $region6: #{tpu_custom_call.1} parent=1 // pred_check
      _
    $region7: #{tpu_custom_call.1} parent=1 // pred_check_branch
      %21 = sbr.rel (0) target = $region9
    $region8: #{tpu_custom_call.1} parent=1 // pred_region
      _
    $region9: #{tpu_custom_call.1} parent=1 // pred_fallthru
      _
    // Predicated region
    $region10: #{tpu_custom_call.1} parent=1 // pred_check
      _
    $region11: #{tpu_custom_call.1} parent=1 // pred_check_branch
      %23 = sbr.rel (0) target = $region13
    $region12: #{tpu_custom_call.1} parent=1 // pred_region
      _
    $region13: #{tpu_custom_call.1} parent=1 // pred_fallthru
      _
    // Predicated region
    $region14: #{tpu_custom_call.1} parent=1 // pred_check
      _
    $region15: #{tpu_custom_call.1} parent=1 // pred_check_branch
      %25 = sbr.rel (0) target = $region17
    $region16: #{tpu_custom_call.1} parent=1 // pred_region
      %26 = dma.done [#allocation4], 32
    $region17: #{tpu_custom_call.1} parent=1 // pred_fallthru
      _
    %27 = sfence
    %v28 = vld [vmem:[%s2] sm:$0x3]
    %s29 = sld [smem:[#allocation2]]
    %p30 = scmp.gt.s32.totalorder %s29, 0
    %s31 = scalar_select %p30, %s29, 0
    %p32 = scmp.lt.s32.totalorder %s31, 4
    %s33 = scalar_select %p32, %s31, 4
    %s34 = scalar_lea.vmem %s1, %s33
    %v35 = vld [vmem:[%s34] sm:$0x1]
    %v36 = vadd.f32 %v35, 0.0
    %s37 = sld [smem:[#allocation2 + $0x1]]
    %p38 = scmp.gt.s32.totalorder %s37, 0
    %s39 = scalar_select %p38, %s37, 0
    %p40 = scmp.lt.s32.totalorder %s39, 4
    %s41 = scalar_select %p40, %s39, 4
    %s42 = scalar_lea.vmem %s1, %s41
    %v43 = vld [vmem:[%s42] sm:$0x1]
    %v44 = vadd.f32 %v36, %v43
    %s45 = sld [smem:[#allocation2 + $0x2]]
    %p46 = scmp.gt.s32.totalorder %s45, 0
    %s47 = scalar_select %p46, %s45, 0
    %p48 = scmp.lt.s32.totalorder %s47, 4
    %s49 = scalar_select %p48, %s47, 4
    %s50 = scalar_lea.vmem %s1, %s49
    %v51 = vld [vmem:[%s50] sm:$0x1]
    %v52 = vadd.f32 %v44, %v51
    %s53 = sld [smem:[#allocation2 + $0x3]]
    %p54 = scmp.gt.s32.totalorder %s53, 0
    %s55 = scalar_select %p54, %s53, 0
    %p56 = scmp.lt.s32.totalorder %s55, 4
    %s57 = scalar_select %p56, %s55, 4
    %s58 = scalar_lea.vmem %s1, %s57
    %v59 = vld [vmem:[%s58] sm:$0x1]
    %v60 = vadd.f32 %v52, %v59
    %s61 = sld [smem:[#allocation2 + $0x4]]
    %p62 = scmp.gt.s32.totalorder %s61, 0
    %s63 = scalar_select %p62, %s61, 0
    %p64 = scmp.lt.s32.totalorder %s63, 4
    %s65 = scalar_select %p64, %s63, 4
    %s66 = scalar_lea.vmem %s1, %s65
    %v67 = vld [vmem:[%s66] sm:$0x1]
    %v68 = vadd.f32 %v60, %v67
    %s69 = sld [smem:[#allocation2 + $0x80]]
    %p70 = scmp.gt.s32.totalorder %s69, 0
    %s71 = scalar_select %p70, %s69, 0
    %p72 = scmp.lt.s32.totalorder %s71, 4
    %s73 = scalar_select %p72, %s71, 4
    %s74 = scalar_lea.vmem %s1, %s73
    %v75 = vld [vmem:[%s74] sm:$0x1]
    %v76 = vadd.f32 %v75, 0.0
    %s77 = sld [smem:[#allocation2 + $0x81]]
    %p78 = scmp.gt.s32.totalorder %s77, 0
    %s79 = scalar_select %p78, %s77, 0
    %p80 = scmp.lt.s32.totalorder %s79, 4
    %s81 = scalar_select %p80, %s79, 4
    %s82 = scalar_lea.vmem %s1, %s81
    %v83 = vld [vmem:[%s82] sm:$0x1]
    %v84 = vadd.f32 %v76, %v83
    %s85 = sld [smem:[#allocation2 + $0x82]]
    %p86 = scmp.gt.s32.totalorder %s85, 0
    %s87 = scalar_select %p86, %s85, 0
    %p88 = scmp.lt.s32.totalorder %s87, 4
    %s89 = scalar_select %p88, %s87, 4
    %s90 = scalar_lea.vmem %s1, %s89
    %v91 = vld [vmem:[%s90] sm:$0x1]
    %v92 = vadd.f32 %v84, %v91
    %s93 = sld [smem:[#allocation2 + $0x83]]
    %p94 = scmp.gt.s32.totalorder %s93, 0
    %s95 = scalar_select %p94, %s93, 0
    %p96 = scmp.lt.s32.totalorder %s95, 4
    %s97 = scalar_select %p96, %s95, 4
    %s98 = scalar_lea.vmem %s1, %s97
    %v99 = vld [vmem:[%s98] sm:$0x1]
    %v100 = vadd.f32 %v92, %v99
    %s101 = sld [smem:[#allocation2 + $0x84]]
    %p102 = scmp.gt.s32.totalorder %s101, 0
    %s103 = scalar_select %p102, %s101, 0
    %p104 = scmp.lt.s32.totalorder %s103, 4
    %s105 = scalar_select %p104, %s103, 4
    %s106 = scalar_lea.vmem %s1, %s105
    %v107 = vld [vmem:[%s106] sm:$0x1]
    %v108 = vadd.f32 %v100, %v107
    %v110 = vlaneseq
    %v111 = vshrl.u32 %v110, 7
    %v112 = vsub.s32 0, %v111
    %v113 = vrot.slane %v108, %v112
    %vm115 = vcmask 1040384
    %v116 = vsel %vm115, %v68, %v113
    %vm117 = vcmask 17408
    %v118 = vsel %vm117, %v116, 0.0
    %119 = vadd.xlane.f32.xlu0 %v118
    %v120 = vpop.xlane.xlu0 %119
    %v121 = vrcp.pop 3.0
    %v122 = vmul.f32 %v120, %v121
    %v123 = vsub.f32 %v116, %v122
    %v124 = vmul.f32 %v123, %v123
    %v125 = vsel %vm117, %v124, 0.0
    %126 = vadd.xlane.f32.xlu0 %v125
    %v127 = vpop.xlane.xlu0 %126
    %v128 = vmul.f32 %v127, %v121
    %v129 = vadd.f32 %v128, 1e-05
    %v130 = vrsqrt.pop %v129
    %v131 = vmul.f32 %v123, %v130
    %v132 = vlaneseq
    %v133 = vshrl.u32 %v132, 7
    %v134 = vsub.s32 0, %v133
    %v135 = vrot.slane %v28, %v134
    %v136 = vmul.f32 %v131, %v135
    %v137 = vlaneseq
    %v138 = vshrl.u32 %v137, 7
    %v139 = vsub.s32 1, %v138
    %v140 = vrot.slane %v28, %v139
    %v141 = vadd.f32 %v136, %v140
    %142 = vst.msk [vmem:[#allocation5] sm:$0x3] %vm117, %v141
    // Predicated region
    $region18: #{tpu_custom_call.1} parent=1 // pred_check
      _
    $region19: #{tpu_custom_call.1} parent=1 // pred_check_branch
      %144 = sbr.rel (0) target = $region21
    $region20: #{tpu_custom_call.1} parent=1 // pred_region
      %s146 = ssub.s32 32, 32
      %147 = vsyncadd [#allocation3], %s146
      %s149 = sshll.u32 [#allocation5], 4
      %s150 = int_to_ptr.vmem [resolvable:$true] %s149
      %152 = dma.vmem_to_hbm [thread:$0]  %s150, 32, %s3, [#allocation3]
    $region21: #{tpu_custom_call.1} parent=1 // pred_fallthru
      _
    // Predicated region
    $region22: #{tpu_custom_call.1} parent=1 // pred_check
      _
    $region23: #{tpu_custom_call.1} parent=1 // pred_check_branch
      %154 = sbr.rel (0) target = $region25
    $region24: #{tpu_custom_call.1} parent=1 // pred_region
      %155 = dma.done [#allocation3], 32
    $region25: #{tpu_custom_call.1} parent=1 // pred_fallthru
      _
    %156 = vsyncpa [#allocation3], 1
    %157 = vsyncpa [#allocation4], 1

</llo_original>
